<compile_context>
chip_gen: v7x
topology: tpu7x:2x2x1
jax: 0.10.0
libtpu: 0.0.40
codegen_flags: <defaults>
</compile_context>

<pallas_src>
import jax
import jax.numpy as jnp
from jax.experimental import pallas as pl
from jax.experimental.pallas import tpu as pltpu


# ----------------------------- kernel ----------------------------------------

def stem_fused_kernel(halo_ref, main_ref, w_ref, shift_ref, o_ref):
    # halo_ref : (1, 1, OWp, K)    bf16  -- patches of conv row 2*PT*j - 1 (clamped to 0)
    # main_ref : (1, 2*PT, OWp, K) bf16  -- patches of conv rows [2*PT*j, 2*PT*j + 2*PT)
    # w_ref    : (K, C)            bf16  -- conv weights with frozen-BN scale folded in
    # shift_ref: (1, C)            f32   -- frozen-BN shift
    # o_ref    : (1, PT, PW, C)    f32   -- pooled rows [PT*j, PT*j + PT)
    two_pt = main_ref.shape[1]
    pt = two_pt // 2
    pw = o_ref.shape[2]

    w = w_ref[...]
    shift = shift_ref[...]

    def conv_row_colpool(lhs):
        # One conv output row: MXU matmul (f32 accumulate) + shift + ReLU, then
        # the 3-wide / stride-2 max over the width. Patch columns are ordered
        # [even ow | odd ow], so every pooling tap is a unit-stride slice.
        y = jnp.dot(lhs, w, preferred_element_type=jnp.float32)   # (OWp, C)
        y = jnp.maximum(y + shift, 0.0)
        ye = y[:pw]                               # conv cols 0, 2, 4, ...
        yo = y[pw:]                               # conv cols 1, 3, 5, ...
        cp = jnp.maximum(ye, yo)
        if pw > 1:
            # yo[pw-1] tap; at pw==0 the duplicate of yo[0] is already in the window.
            prev = jnp.concatenate([yo[:1], yo[:pw - 1]], axis=0)
            cp = jnp.maximum(cp, prev)
        return cp                                 # (PW, C)

    cps = [conv_row_colpool(halo_ref[0, 0])]
    for l in range(two_pt):
        cps.append(conv_row_colpool(main_ref[0, l]))

    # Row pool: pooled row q uses conv rows (2q-1, 2q, 2q+1) == cps[2q : 2q+3].
    for q in range(pt):
        o_ref[0, q] = jnp.maximum(jnp.maximum(cps[2 * q], cps[2 * q + 1]),
                                  cps[2 * q + 2]).astype(o_ref.dtype)


# ----------------------------- wrapper ----------------------------------------

def base_stem_forward(x_nchw, w_oihw, gamma, beta, running_mean, running_var,
                      eps=1e-5):
    N, Cin, H, W = x_nchw.shape
    Cout = w_oihw.shape[0]
    k, stride, pad = 7, 2, 3
    OH = (H + 2 * pad - k) // stride + 1
    OW = (W + 2 * pad - k) // stride + 1
    PH = (OH + 2 * 1 - 3) // 2 + 1
    PW = (OW + 2 * 1 - 3) // 2 + 1
    KK = k * k * Cin

    # frozen BN folded into the conv weights (scale) + a per-channel shift.
    scale = gamma * jax.lax.rsqrt(running_var + eps)
    shift = beta - running_mean * scale
    w_mat = jnp.transpose(w_oihw, (2, 3, 1, 0)).reshape(KK, Cout)
    w_mat = (w_mat * scale[None, :]).astype(jnp.bfloat16)
    shift2 = shift.reshape(1, Cout).astype(jnp.float32)

    # --- glue: im2col patch extraction (bf16, K kept at 147 in HBM) ---
    x = jnp.transpose(x_nchw, (0, 2, 3, 1)).astype(jnp.bfloat16)      # NHWC
    xp = jnp.pad(x, ((0, 0), (pad, pad), (pad, pad), (0, 0)))
    taps = []
    for kh in range(k):
        for kw in range(k):
            taps.append(xp[:, kh:kh + stride * (OH - 1) + 1:stride,
                               kw:kw + stride * (OW - 1) + 1:stride, :])
    patches = jnp.stack(taps, axis=3).reshape(N, OH, OW, KK)          # (N, OH, OW, 147)

    # Width: reorder conv columns into [even ow | odd ow] so every pooling tap
    # in the kernel is a unit-stride slice; pad OW to even with a duplicate of
    # the last column (duplicates inside a max window are no-ops).
    OWp = OW + (OW % 2)                                               # == 2 * PW
    col_idx = jnp.minimum(
        jnp.concatenate([jnp.arange(0, OWp, 2), jnp.arange(1, OWp, 2)]), OW - 1)
    patches = patches[:, :, col_idx, :]                               # (N, OH, OWp, 147)

    # Rows: pooled-row chunk size PT chosen so one grid step's conv tile is
    # ~8k patch rows; pad the conv-row count to a multiple of 2*PT with
    # duplicates of the last row (covers odd-OH pool padding + chunk padding).
    TARGET_ROWS = 8192
    PT = max(1, min(PH, TARGET_ROWS // (2 * OWp)))
    n_chunks = -(-PH // PT)
    OHp = 2 * PT * n_chunks
    if OHp > OH:
        patches = jnp.concatenate(
            [patches,
             jnp.broadcast_to(patches[:, OH - 1:OH], (N, OHp - OH, OWp, KK))],
            axis=1)

    flops = 2 * N * n_chunks * (2 * PT + 1) * OWp * KK * Cout
    patch_bytes = N * n_chunks * (2 * PT + 1) * OWp * KK * 2
    out_bytes = N * n_chunks * PT * PW * Cout * 4
    cost = pl.CostEstimate(flops=int(flops), transcendentals=0,
                           bytes_accessed=int(patch_bytes + out_bytes
                                              + KK * Cout * 2 + Cout * 4))

    out = pl.pallas_call(
        stem_fused_kernel,
        out_shape=jax.ShapeDtypeStruct((N, n_chunks * PT, PW, Cout), jnp.float32),
        grid_spec=pltpu.PrefetchScalarGridSpec(
            num_scalar_prefetch=0,
            grid=(N, n_chunks),
            in_specs=[
                # 1-conv-row pooling halo (conv row 2*PT*j - 1, clamped to 0;
                # the duplicate at j == 0 is already in the pooling window).
                pl.BlockSpec((1, 1, OWp, KK),
                             lambda n, j: (n, jnp.maximum(2 * PT * j - 1, 0), 0, 0)),
                # main tile: 2*PT conv rows of this chunk.
                pl.BlockSpec((1, 2 * PT, OWp, KK), lambda n, j: (n, j, 0, 0)),
                pl.BlockSpec((KK, Cout), lambda n, j: (0, 0)),
                pl.BlockSpec((1, Cout), lambda n, j: (0, 0)),
            ],
            out_specs=pl.BlockSpec((1, PT, PW, Cout), lambda n, j: (n, j, 0, 0)),
        ),
        compiler_params=pltpu.CompilerParams(
            dimension_semantics=("parallel", "parallel"),
            vmem_limit_bytes=32 * 1024 * 1024),
        cost_estimate=cost,
    )(patches, patches, w_mat, shift2)

    pooled = out[:, :PH]                                              # (N, PH, PW, C)
    return jnp.transpose(pooled, (0, 3, 1, 2))                        # back to NCHW


# ----------------------------- main -------------------------------------------

if __name__ == "__main__":
    key = jax.random.PRNGKey(0)
    k1, k2, k3, k4, k5, k6 = jax.random.split(key, 6)

    N, Cin, H, W = 2, 3, 16, 16        # conv1 requires 3 input channels
    Cout = 64                          # cfg.MODEL.RESNETS.STEM_OUT_CHANNELS

    x = jax.random.normal(k1, (N, Cin, H, W), jnp.float32)

    # kaiming_uniform_(a=1): bound = sqrt(6 / ((1 + a^2) * fan_in)) = sqrt(3/fan_in)
    fan_in = Cin * 7 * 7
    bound = (3.0 / fan_in) ** 0.5
    w = jax.random.uniform(k2, (Cout, Cin, 7, 7), jnp.float32, -bound, bound)

    gamma = jax.random.uniform(k3, (Cout,), jnp.float32, 0.5, 1.5)
    beta = 0.1 * jax.random.normal(k4, (Cout,), jnp.float32)
    running_mean = 0.1 * jax.random.normal(k5, (Cout,), jnp.float32)
    running_var = jax.random.uniform(k6, (Cout,), jnp.float32, 0.5, 1.5)

    out = base_stem_forward(x, w, gamma, beta, running_mean, running_var)
    out = jax.block_until_ready(out)

    # pure-JAX reference (operands rounded to bf16 exactly like the kernel path)
    eps = 1e-5
    scale = gamma * jax.lax.rsqrt(running_var + eps)
    shift = beta - running_mean * scale
    xb = x.astype(jnp.bfloat16).astype(jnp.float32)
    wf = (w * scale[:, None, None, None]).astype(jnp.bfloat16).astype(jnp.float32)
    ref = jax.lax.conv_general_dilated(
        xb, wf, (2, 2), ((3, 3), (3, 3)),
        dimension_numbers=("NCHW", "OIHW", "NCHW"),
        precision=jax.lax.Precision.HIGHEST)
    ref = ref + shift[None, :, None, None]
    ref = jnp.maximum(ref, 0.0)
    ref = jax.lax.reduce_window(
        ref, -jnp.inf, jax.lax.max,
        (1, 1, 3, 3), (1, 1, 2, 2), ((0, 0), (0, 0), (1, 1), (1, 1)))

    assert out.shape == ref.shape, (out.shape, ref.shape)
    assert jnp.allclose(out, ref, atol=1e-3, rtol=1e-3), float(
        jnp.max(jnp.abs(out - ref)))
    print("KERNEL_OK")
</pallas_src>

<mosaic_0001>
module attributes {stable_mosaic.version = 11 : i64} {
  func.func @stem_fused_kernel(%arg0: i32, %arg1: i32, %arg2: memref<1x1x8x147xbf16, #tpu.memory_space<vmem>>, %arg3: memref<1x8x8x147xbf16, #tpu.memory_space<vmem>>, %arg4: memref<147x64xbf16, #tpu.memory_space<vmem>>, %arg5: memref<1x64xf32, #tpu.memory_space<vmem>>, %arg6: memref<1x4x4x64xf32, #tpu.memory_space<vmem>>) attributes {dimension_semantics = [#tpu.dimension_semantics<parallel>, #tpu.dimension_semantics<parallel>], iteration_bounds = array<i64: 2, 1>, scalar_prefetch = 0 : i64, scratch_operands = 0 : i64, tpu.core_type = #tpu.core_type<tc>, window_params = [{transform_indices = @transform_0, window_bounds = array<i64: 1, 1, 8, 147>}, {transform_indices = @transform_1, window_bounds = array<i64: 1, 8, 8, 147>}, {pipeline_mode = #tpu.pipeline_mode<synchronous>, transform_indices = @transform_2, window_bounds = array<i64: 147, 64>}, {pipeline_mode = #tpu.pipeline_mode<synchronous>, transform_indices = @transform_3, window_bounds = array<i64: 1, 64>}, {transform_indices = @transform_4, window_bounds = array<i64: 1, 4, 4, 64>}]} {
    %c0 = arith.constant 0 : index
    %c0_0 = arith.constant 0 : index
    %0 = vector.load %arg4[%c0, %c0_0] : memref<147x64xbf16, #tpu.memory_space<vmem>>, vector<147x64xbf16>
    %c0_1 = arith.constant 0 : index
    %c0_2 = arith.constant 0 : index
    %1 = vector.load %arg5[%c0_1, %c0_2] : memref<1x64xf32, #tpu.memory_space<vmem>>, vector<1x64xf32>
    %c0_3 = arith.constant 0 : index
    %c0_4 = arith.constant 0 : index
    %c0_5 = arith.constant 0 : index
    %c0_6 = arith.constant 0 : index
    %2 = vector.load %arg2[%c0_3, %c0_4, %c0_5, %c0_6] : memref<1x1x8x147xbf16, #tpu.memory_space<vmem>>, vector<1x1x8x147xbf16>
    %3 = vector.shape_cast %2 : vector<1x1x8x147xbf16> to vector<8x147xbf16>
    %cst = arith.constant dense<0.000000e+00> : vector<8x64xf32>
    %4 = tpu.matmul %3, %0, %cst {dimension_numbers = #tpu.dot_dimension_numbers<[1], [0], [0], [1], [0, 0, 1, 1], [], []>} : vector<8x147xbf16>, vector<147x64xbf16>, vector<8x64xf32> -> vector<8x64xf32>
    %5 = vector.broadcast %1 : vector<1x64xf32> to vector<8x64xf32>
    %6 = arith.addf %4, %5 : vector<8x64xf32>
    %cst_7 = arith.constant 0.000000e+00 : f32
    %7 = vector.broadcast %cst_7 : f32 to vector<8x64xf32>
    %8 = arith.maximumf %6, %7 : vector<8x64xf32>
    %9 = vector.extract_strided_slice %8 {offsets = [0, 0], sizes = [4, 64], strides = [1, 1]} : vector<8x64xf32> to vector<4x64xf32>
    %10 = vector.extract_strided_slice %8 {offsets = [4, 0], sizes = [4, 64], strides = [1, 1]} : vector<8x64xf32> to vector<4x64xf32>
    %11 = arith.maximumf %9, %10 : vector<4x64xf32>
    %12 = vector.extract_strided_slice %10 {offsets = [0, 0], sizes = [1, 64], strides = [1, 1]} : vector<4x64xf32> to vector<1x64xf32>
    %13 = vector.extract_strided_slice %10 {offsets = [0, 0], sizes = [3, 64], strides = [1, 1]} : vector<4x64xf32> to vector<3x64xf32>
    %14 = tpu.concatenate %12, %13 in 0 : vector<1x64xf32>, vector<3x64xf32> -> vector<4x64xf32>
    %15 = arith.maximumf %11, %14 : vector<4x64xf32>
    %c0_8 = arith.constant 0 : index
    %c0_9 = arith.constant 0 : index
    %c0_10 = arith.constant 0 : index
    %c0_11 = arith.constant 0 : index
    %16 = vector.load %arg3[%c0_8, %c0_9, %c0_10, %c0_11] : memref<1x8x8x147xbf16, #tpu.memory_space<vmem>>, vector<1x1x8x147xbf16>
    %17 = vector.shape_cast %16 : vector<1x1x8x147xbf16> to vector<8x147xbf16>
    %cst_12 = arith.constant dense<0.000000e+00> : vector<8x64xf32>
    %18 = tpu.matmul %17, %0, %cst_12 {dimension_numbers = #tpu.dot_dimension_numbers<[1], [0], [0], [1], [0, 0, 1, 1], [], []>} : vector<8x147xbf16>, vector<147x64xbf16>, vector<8x64xf32> -> vector<8x64xf32>
    %19 = vector.broadcast %1 : vector<1x64xf32> to vector<8x64xf32>
    %20 = arith.addf %18, %19 : vector<8x64xf32>
    %cst_13 = arith.constant 0.000000e+00 : f32
    %21 = vector.broadcast %cst_13 : f32 to vector<8x64xf32>
    %22 = arith.maximumf %20, %21 : vector<8x64xf32>
    %23 = vector.extract_strided_slice %22 {offsets = [0, 0], sizes = [4, 64], strides = [1, 1]} : vector<8x64xf32> to vector<4x64xf32>
    %24 = vector.extract_strided_slice %22 {offsets = [4, 0], sizes = [4, 64], strides = [1, 1]} : vector<8x64xf32> to vector<4x64xf32>
    %25 = arith.maximumf %23, %24 : vector<4x64xf32>
    %26 = vector.extract_strided_slice %24 {offsets = [0, 0], sizes = [1, 64], strides = [1, 1]} : vector<4x64xf32> to vector<1x64xf32>
    %27 = vector.extract_strided_slice %24 {offsets = [0, 0], sizes = [3, 64], strides = [1, 1]} : vector<4x64xf32> to vector<3x64xf32>
    %28 = tpu.concatenate %26, %27 in 0 : vector<1x64xf32>, vector<3x64xf32> -> vector<4x64xf32>
    %29 = arith.maximumf %25, %28 : vector<4x64xf32>
    %c0_14 = arith.constant 0 : index
    %c1 = arith.constant 1 : index
    %c0_15 = arith.constant 0 : index
    %c0_16 = arith.constant 0 : index
    %30 = vector.load %arg3[%c0_14, %c1, %c0_15, %c0_16] : memref<1x8x8x147xbf16, #tpu.memory_space<vmem>>, vector<1x1x8x147xbf16>
    %31 = vector.shape_cast %30 : vector<1x1x8x147xbf16> to vector<8x147xbf16>
    %cst_17 = arith.constant dense<0.000000e+00> : vector<8x64xf32>
    %32 = tpu.matmul %31, %0, %cst_17 {dimension_numbers = #tpu.dot_dimension_numbers<[1], [0], [0], [1], [0, 0, 1, 1], [], []>} : vector<8x147xbf16>, vector<147x64xbf16>, vector<8x64xf32> -> vector<8x64xf32>
    %33 = vector.broadcast %1 : vector<1x64xf32> to vector<8x64xf32>
    %34 = arith.addf %32, %33 : vector<8x64xf32>
    %cst_18 = arith.constant 0.000000e+00 : f32
    %35 = vector.broadcast %cst_18 : f32 to vector<8x64xf32>
    %36 = arith.maximumf %34, %35 : vector<8x64xf32>
    %37 = vector.extract_strided_slice %36 {offsets = [0, 0], sizes = [4, 64], strides = [1, 1]} : vector<8x64xf32> to vector<4x64xf32>
    %38 = vector.extract_strided_slice %36 {offsets = [4, 0], sizes = [4, 64], strides = [1, 1]} : vector<8x64xf32> to vector<4x64xf32>
    %39 = arith.maximumf %37, %38 : vector<4x64xf32>
    %40 = vector.extract_strided_slice %38 {offsets = [0, 0], sizes = [1, 64], strides = [1, 1]} : vector<4x64xf32> to vector<1x64xf32>
    %41 = vector.extract_strided_slice %38 {offsets = [0, 0], sizes = [3, 64], strides = [1, 1]} : vector<4x64xf32> to vector<3x64xf32>
    %42 = tpu.concatenate %40, %41 in 0 : vector<1x64xf32>, vector<3x64xf32> -> vector<4x64xf32>
    %43 = arith.maximumf %39, %42 : vector<4x64xf32>
    %c0_19 = arith.constant 0 : index
    %c2 = arith.constant 2 : index
    %c0_20 = arith.constant 0 : index
    %c0_21 = arith.constant 0 : index
    %44 = vector.load %arg3[%c0_19, %c2, %c0_20, %c0_21] : memref<1x8x8x147xbf16, #tpu.memory_space<vmem>>, vector<1x1x8x147xbf16>
    %45 = vector.shape_cast %44 : vector<1x1x8x147xbf16> to vector<8x147xbf16>
    %cst_22 = arith.constant dense<0.000000e+00> : vector<8x64xf32>
    %46 = tpu.matmul %45, %0, %cst_22 {dimension_numbers = #tpu.dot_dimension_numbers<[1], [0], [0], [1], [0, 0, 1, 1], [], []>} : vector<8x147xbf16>, vector<147x64xbf16>, vector<8x64xf32> -> vector<8x64xf32>
    %47 = vector.broadcast %1 : vector<1x64xf32> to vector<8x64xf32>
    %48 = arith.addf %46, %47 : vector<8x64xf32>
    %cst_23 = arith.constant 0.000000e+00 : f32
    %49 = vector.broadcast %cst_23 : f32 to vector<8x64xf32>
    %50 = arith.maximumf %48, %49 : vector<8x64xf32>
    %51 = vector.extract_strided_slice %50 {offsets = [0, 0], sizes = [4, 64], strides = [1, 1]} : vector<8x64xf32> to vector<4x64xf32>
    %52 = vector.extract_strided_slice %50 {offsets = [4, 0], sizes = [4, 64], strides = [1, 1]} : vector<8x64xf32> to vector<4x64xf32>
    %53 = arith.maximumf %51, %52 : vector<4x64xf32>
    %54 = vector.extract_strided_slice %52 {offsets = [0, 0], sizes = [1, 64], strides = [1, 1]} : vector<4x64xf32> to vector<1x64xf32>
    %55 = vector.extract_strided_slice %52 {offsets = [0, 0], sizes = [3, 64], strides = [1, 1]} : vector<4x64xf32> to vector<3x64xf32>
    %56 = tpu.concatenate %54, %55 in 0 : vector<1x64xf32>, vector<3x64xf32> -> vector<4x64xf32>
    %57 = arith.maximumf %53, %56 : vector<4x64xf32>
    %c0_24 = arith.constant 0 : index
    %c3 = arith.constant 3 : index
    %c0_25 = arith.constant 0 : index
    %c0_26 = arith.constant 0 : index
    %58 = vector.load %arg3[%c0_24, %c3, %c0_25, %c0_26] : memref<1x8x8x147xbf16, #tpu.memory_space<vmem>>, vector<1x1x8x147xbf16>
    %59 = vector.shape_cast %58 : vector<1x1x8x147xbf16> to vector<8x147xbf16>
    %cst_27 = arith.constant dense<0.000000e+00> : vector<8x64xf32>
    %60 = tpu.matmul %59, %0, %cst_27 {dimension_numbers = #tpu.dot_dimension_numbers<[1], [0], [0], [1], [0, 0, 1, 1], [], []>} : vector<8x147xbf16>, vector<147x64xbf16>, vector<8x64xf32> -> vector<8x64xf32>
    %61 = vector.broadcast %1 : vector<1x64xf32> to vector<8x64xf32>
    %62 = arith.addf %60, %61 : vector<8x64xf32>
    %cst_28 = arith.constant 0.000000e+00 : f32
    %63 = vector.broadcast %cst_28 : f32 to vector<8x64xf32>
    %64 = arith.maximumf %62, %63 : vector<8x64xf32>
    %65 = vector.extract_strided_slice %64 {offsets = [0, 0], sizes = [4, 64], strides = [1, 1]} : vector<8x64xf32> to vector<4x64xf32>
    %66 = vector.extract_strided_slice %64 {offsets = [4, 0], sizes = [4, 64], strides = [1, 1]} : vector<8x64xf32> to vector<4x64xf32>
    %67 = arith.maximumf %65, %66 : vector<4x64xf32>
    %68 = vector.extract_strided_slice %66 {offsets = [0, 0], sizes = [1, 64], strides = [1, 1]} : vector<4x64xf32> to vector<1x64xf32>
    %69 = vector.extract_strided_slice %66 {offsets = [0, 0], sizes = [3, 64], strides = [1, 1]} : vector<4x64xf32> to vector<3x64xf32>
    %70 = tpu.concatenate %68, %69 in 0 : vector<1x64xf32>, vector<3x64xf32> -> vector<4x64xf32>
    %71 = arith.maximumf %67, %70 : vector<4x64xf32>
    %c0_29 = arith.constant 0 : index
    %c4 = arith.constant 4 : index
    %c0_30 = arith.constant 0 : index
    %c0_31 = arith.constant 0 : index
    %72 = vector.load %arg3[%c0_29, %c4, %c0_30, %c0_31] : memref<1x8x8x147xbf16, #tpu.memory_space<vmem>>, vector<1x1x8x147xbf16>
    %73 = vector.shape_cast %72 : vector<1x1x8x147xbf16> to vector<8x147xbf16>
    %cst_32 = arith.constant dense<0.000000e+00> : vector<8x64xf32>
    %74 = tpu.matmul %73, %0, %cst_32 {dimension_numbers = #tpu.dot_dimension_numbers<[1], [0], [0], [1], [0, 0, 1, 1], [], []>} : vector<8x147xbf16>, vector<147x64xbf16>, vector<8x64xf32> -> vector<8x64xf32>
    %75 = vector.broadcast %1 : vector<1x64xf32> to vector<8x64xf32>
    %76 = arith.addf %74, %75 : vector<8x64xf32>
    %cst_33 = arith.constant 0.000000e+00 : f32
    %77 = vector.broadcast %cst_33 : f32 to vector<8x64xf32>
    %78 = arith.maximumf %76, %77 : vector<8x64xf32>
    %79 = vector.extract_strided_slice %78 {offsets = [0, 0], sizes = [4, 64], strides = [1, 1]} : vector<8x64xf32> to vector<4x64xf32>
    %80 = vector.extract_strided_slice %78 {offsets = [4, 0], sizes = [4, 64], strides = [1, 1]} : vector<8x64xf32> to vector<4x64xf32>
    %81 = arith.maximumf %79, %80 : vector<4x64xf32>
    %82 = vector.extract_strided_slice %80 {offsets = [0, 0], sizes = [1, 64], strides = [1, 1]} : vector<4x64xf32> to vector<1x64xf32>
    %83 = vector.extract_strided_slice %80 {offsets = [0, 0], sizes = [3, 64], strides = [1, 1]} : vector<4x64xf32> to vector<3x64xf32>
    %84 = tpu.concatenate %82, %83 in 0 : vector<1x64xf32>, vector<3x64xf32> -> vector<4x64xf32>
    %85 = arith.maximumf %81, %84 : vector<4x64xf32>
    %c0_34 = arith.constant 0 : index
    %c5 = arith.constant 5 : index
    %c0_35 = arith.constant 0 : index
    %c0_36 = arith.constant 0 : index
    %86 = vector.load %arg3[%c0_34, %c5, %c0_35, %c0_36] : memref<1x8x8x147xbf16, #tpu.memory_space<vmem>>, vector<1x1x8x147xbf16>
    %87 = vector.shape_cast %86 : vector<1x1x8x147xbf16> to vector<8x147xbf16>
    %cst_37 = arith.constant dense<0.000000e+00> : vector<8x64xf32>
    %88 = tpu.matmul %87, %0, %cst_37 {dimension_numbers = #tpu.dot_dimension_numbers<[1], [0], [0], [1], [0, 0, 1, 1], [], []>} : vector<8x147xbf16>, vector<147x64xbf16>, vector<8x64xf32> -> vector<8x64xf32>
    %89 = vector.broadcast %1 : vector<1x64xf32> to vector<8x64xf32>
    %90 = arith.addf %88, %89 : vector<8x64xf32>
    %cst_38 = arith.constant 0.000000e+00 : f32
    %91 = vector.broadcast %cst_38 : f32 to vector<8x64xf32>
    %92 = arith.maximumf %90, %91 : vector<8x64xf32>
    %93 = vector.extract_strided_slice %92 {offsets = [0, 0], sizes = [4, 64], strides = [1, 1]} : vector<8x64xf32> to vector<4x64xf32>
    %94 = vector.extract_strided_slice %92 {offsets = [4, 0], sizes = [4, 64], strides = [1, 1]} : vector<8x64xf32> to vector<4x64xf32>
    %95 = arith.maximumf %93, %94 : vector<4x64xf32>
    %96 = vector.extract_strided_slice %94 {offsets = [0, 0], sizes = [1, 64], strides = [1, 1]} : vector<4x64xf32> to vector<1x64xf32>
    %97 = vector.extract_strided_slice %94 {offsets = [0, 0], sizes = [3, 64], strides = [1, 1]} : vector<4x64xf32> to vector<3x64xf32>
    %98 = tpu.concatenate %96, %97 in 0 : vector<1x64xf32>, vector<3x64xf32> -> vector<4x64xf32>
    %99 = arith.maximumf %95, %98 : vector<4x64xf32>
    %c0_39 = arith.constant 0 : index
    %c6 = arith.constant 6 : index
    %c0_40 = arith.constant 0 : index
    %c0_41 = arith.constant 0 : index
    %100 = vector.load %arg3[%c0_39, %c6, %c0_40, %c0_41] : memref<1x8x8x147xbf16, #tpu.memory_space<vmem>>, vector<1x1x8x147xbf16>
    %101 = vector.shape_cast %100 : vector<1x1x8x147xbf16> to vector<8x147xbf16>
    %cst_42 = arith.constant dense<0.000000e+00> : vector<8x64xf32>
    %102 = tpu.matmul %101, %0, %cst_42 {dimension_numbers = #tpu.dot_dimension_numbers<[1], [0], [0], [1], [0, 0, 1, 1], [], []>} : vector<8x147xbf16>, vector<147x64xbf16>, vector<8x64xf32> -> vector<8x64xf32>
    %103 = vector.broadcast %1 : vector<1x64xf32> to vector<8x64xf32>
    %104 = arith.addf %102, %103 : vector<8x64xf32>
    %cst_43 = arith.constant 0.000000e+00 : f32
    %105 = vector.broadcast %cst_43 : f32 to vector<8x64xf32>
    %106 = arith.maximumf %104, %105 : vector<8x64xf32>
    %107 = vector.extract_strided_slice %106 {offsets = [0, 0], sizes = [4, 64], strides = [1, 1]} : vector<8x64xf32> to vector<4x64xf32>
    %108 = vector.extract_strided_slice %106 {offsets = [4, 0], sizes = [4, 64], strides = [1, 1]} : vector<8x64xf32> to vector<4x64xf32>
    %109 = arith.maximumf %107, %108 : vector<4x64xf32>
    %110 = vector.extract_strided_slice %108 {offsets = [0, 0], sizes = [1, 64], strides = [1, 1]} : vector<4x64xf32> to vector<1x64xf32>
    %111 = vector.extract_strided_slice %108 {offsets = [0, 0], sizes = [3, 64], strides = [1, 1]} : vector<4x64xf32> to vector<3x64xf32>
    %112 = tpu.concatenate %110, %111 in 0 : vector<1x64xf32>, vector<3x64xf32> -> vector<4x64xf32>
    %113 = arith.maximumf %109, %112 : vector<4x64xf32>
    %c0_44 = arith.constant 0 : index
    %c7 = arith.constant 7 : index
    %c0_45 = arith.constant 0 : index
    %c0_46 = arith.constant 0 : index
    %114 = vector.load %arg3[%c0_44, %c7, %c0_45, %c0_46] : memref<1x8x8x147xbf16, #tpu.memory_space<vmem>>, vector<1x1x8x147xbf16>
    %115 = vector.shape_cast %114 : vector<1x1x8x147xbf16> to vector<8x147xbf16>
    %cst_47 = arith.constant dense<0.000000e+00> : vector<8x64xf32>
    %116 = tpu.matmul %115, %0, %cst_47 {dimension_numbers = #tpu.dot_dimension_numbers<[1], [0], [0], [1], [0, 0, 1, 1], [], []>} : vector<8x147xbf16>, vector<147x64xbf16>, vector<8x64xf32> -> vector<8x64xf32>
    %117 = vector.broadcast %1 : vector<1x64xf32> to vector<8x64xf32>
    %118 = arith.addf %116, %117 : vector<8x64xf32>
    %cst_48 = arith.constant 0.000000e+00 : f32
    %119 = vector.broadcast %cst_48 : f32 to vector<8x64xf32>
    %120 = arith.maximumf %118, %119 : vector<8x64xf32>
    %121 = vector.extract_strided_slice %120 {offsets = [0, 0], sizes = [4, 64], strides = [1, 1]} : vector<8x64xf32> to vector<4x64xf32>
    %122 = vector.extract_strided_slice %120 {offsets = [4, 0], sizes = [4, 64], strides = [1, 1]} : vector<8x64xf32> to vector<4x64xf32>
    %123 = arith.maximumf %121, %122 : vector<4x64xf32>
    %124 = vector.extract_strided_slice %122 {offsets = [0, 0], sizes = [1, 64], strides = [1, 1]} : vector<4x64xf32> to vector<1x64xf32>
    %125 = vector.extract_strided_slice %122 {offsets = [0, 0], sizes = [3, 64], strides = [1, 1]} : vector<4x64xf32> to vector<3x64xf32>
    %126 = tpu.concatenate %124, %125 in 0 : vector<1x64xf32>, vector<3x64xf32> -> vector<4x64xf32>
    %127 = arith.maximumf %123, %126 : vector<4x64xf32>
    %128 = arith.maximumf %15, %29 : vector<4x64xf32>
    %129 = arith.maximumf %128, %43 : vector<4x64xf32>
    %c0_49 = arith.constant 0 : index
    %c0_50 = arith.constant 0 : index
    %c0_51 = arith.constant 0 : index
    %c0_52 = arith.constant 0 : index
    %130 = vector.load %arg6[%c0_49, %c0_50, %c0_51, %c0_52] : memref<1x4x4x64xf32, #tpu.memory_space<vmem>>, vector<1x1x4x64xf32>
    %131 = vector.shape_cast %130 : vector<1x1x4x64xf32> to vector<4x64xf32>
    %132 = vector.shape_cast %129 : vector<4x64xf32> to vector<1x1x4x64xf32>
    tpu.vector_store %arg6[%c0_49, %c0_50, %c0_51, %c0_52], %132 {strides = array<i32>} : memref<1x4x4x64xf32, #tpu.memory_space<vmem>>, vector<1x1x4x64xf32>,
    %133 = arith.maximumf %43, %57 : vector<4x64xf32>
    %134 = arith.maximumf %133, %71 : vector<4x64xf32>
    %c0_53 = arith.constant 0 : index
    %c1_54 = arith.constant 1 : index
    %c0_55 = arith.constant 0 : index
    %c0_56 = arith.constant 0 : index
    %135 = vector.load %arg6[%c0_53, %c1_54, %c0_55, %c0_56] : memref<1x4x4x64xf32, #tpu.memory_space<vmem>>, vector<1x1x4x64xf32>
    %136 = vector.shape_cast %135 : vector<1x1x4x64xf32> to vector<4x64xf32>
    %137 = vector.shape_cast %134 : vector<4x64xf32> to vector<1x1x4x64xf32>
    tpu.vector_store %arg6[%c0_53, %c1_54, %c0_55, %c0_56], %137 {strides = array<i32>} : memref<1x4x4x64xf32, #tpu.memory_space<vmem>>, vector<1x1x4x64xf32>,
    %138 = arith.maximumf %71, %85 : vector<4x64xf32>
    %139 = arith.maximumf %138, %99 : vector<4x64xf32>
    %c0_57 = arith.constant 0 : index
    %c2_58 = arith.constant 2 : index
    %c0_59 = arith.constant 0 : index
    %c0_60 = arith.constant 0 : index
    %140 = vector.load %arg6[%c0_57, %c2_58, %c0_59, %c0_60] : memref<1x4x4x64xf32, #tpu.memory_space<vmem>>, vector<1x1x4x64xf32>
    %141 = vector.shape_cast %140 : vector<1x1x4x64xf32> to vector<4x64xf32>
    %142 = vector.shape_cast %139 : vector<4x64xf32> to vector<1x1x4x64xf32>
    tpu.vector_store %arg6[%c0_57, %c2_58, %c0_59, %c0_60], %142 {strides = array<i32>} : memref<1x4x4x64xf32, #tpu.memory_space<vmem>>, vector<1x1x4x64xf32>,
    %143 = arith.maximumf %99, %113 : vector<4x64xf32>
    %144 = arith.maximumf %143, %127 : vector<4x64xf32>
    %c0_61 = arith.constant 0 : index
    %c3_62 = arith.constant 3 : index
    %c0_63 = arith.constant 0 : index
    %c0_64 = arith.constant 0 : index
    %145 = vector.load %arg6[%c0_61, %c3_62, %c0_63, %c0_64] : memref<1x4x4x64xf32, #tpu.memory_space<vmem>>, vector<1x1x4x64xf32>
    %146 = vector.shape_cast %145 : vector<1x1x4x64xf32> to vector<4x64xf32>
    %147 = vector.shape_cast %144 : vector<4x64xf32> to vector<1x1x4x64xf32>
    tpu.vector_store %arg6[%c0_61, %c3_62, %c0_63, %c0_64], %147 {strides = array<i32>} : memref<1x4x4x64xf32, #tpu.memory_space<vmem>>, vector<1x1x4x64xf32>,
    return
  }
  func.func @transform_0(%arg0: i32, %arg1: i32) -> (i32, i32, i32, i32) {
    %c8_i32 = arith.constant 8 : i32
    %0 = arith.muli %c8_i32, %arg1 : i32
    %c1_i32 = arith.constant 1 : i32
    %1 = arith.subi %0, %c1_i32 : i32
    %c0_i32 = arith.constant 0 : i32
    %2 = arith.maxsi %1, %c0_i32 : i32
    %c0_i32_0 = arith.constant 0 : i32
    %c0_i32_1 = arith.constant 0 : i32
    %c0_i32_2 = arith.constant 0 : i32
    return %arg0, %2, %c0_i32_0, %c0_i32_1 : i32, i32, i32, i32
  }
  func.func @transform_1(%arg0: i32, %arg1: i32) -> (i32, i32, i32, i32) {
    %c0_i32 = arith.constant 0 : i32
    %c0_i32_0 = arith.constant 0 : i32
    %c0_i32_1 = arith.constant 0 : i32
    return %arg0, %arg1, %c0_i32, %c0_i32_0 : i32, i32, i32, i32
  }
  func.func @transform_2(%arg0: i32, %arg1: i32) -> (i32, i32) {
    %c0_i32 = arith.constant 0 : i32
    %c0_i32_0 = arith.constant 0 : i32
    %c0_i32_1 = arith.constant 0 : i32
    return %c0_i32, %c0_i32_0 : i32, i32
  }
  func.func @transform_3(%arg0: i32, %arg1: i32) -> (i32, i32) {
    %c0_i32 = arith.constant 0 : i32
    %c0_i32_0 = arith.constant 0 : i32
    %c0_i32_1 = arith.constant 0 : i32
    return %c0_i32, %c0_i32_0 : i32, i32
  }
  func.func @transform_4(%arg0: i32, %arg1: i32) -> (i32, i32, i32, i32) {
    %c0_i32 = arith.constant 0 : i32
    %c0_i32_0 = arith.constant 0 : i32
    %c0_i32_1 = arith.constant 0 : i32
    return %arg0, %arg1, %c0_i32, %c0_i32_0 : i32, i32, i32, i32
  }
}

</mosaic_0001>

<llo_original>
// kernel: tpu_custom_call.1
$region0: #{tpu_custom_call.1}
  #allocation0 [shape = 'u32[]', space=smem, size = 0x4, offset = 0x4, fixed_abs, tag = 'smem constant byte address 0x4 - core index']
  #allocation1 [shape = 'u32[144,128]{1,0:T(1,128)}', space=vmem, size = 0x12000, scoped, tag = 'internal scratch']
  %s0 = inlined_call_operand.vmem [shape: bf16[2,8,8,147], index: 0, kind: input, shape index: {}]
  %s1 = inlined_call_operand.hbm [shape: bf16[2,8,8,147], index: 1, kind: input, shape index: {}]
  %s2 = inlined_call_operand.vmem [shape: bf16[147,64], index: 2, kind: input, shape index: {}]
  %s3 = inlined_call_operand.vmem [shape: f32[1,64], index: 3, kind: input, shape index: {}]
  %s4 = inlined_call_operand.hbm [shape: f32[2,4,4,64], index: 4, kind: output, shape index: {}]
  %s5 = sld [smem:[#allocation0]]
  $region53: #{tpu_custom_call.1} parent=0
    _
  %s7 = ssub.s32 1, %s5
  %s8 = scalar_select 0, %s7, %s5
  $region1: #{tpu_custom_call.1} parent=0
    #allocation2 [shape = 'u8[65536]{0}', space=vmem, size = 0x10000, scoped, tag = 'input window, operand 1']
    #allocation3 [shape = 's32[2]{0}', space=sflag, size = 0x8, scoped, tag = 'scoped memory for tpu_custom_call.1']
    #allocation4 [shape = 's32[2]{0}', space=sflag, size = 0x8, scoped, tag = 'scoped memory for tpu_custom_call.1']
    #allocation5 [shape = 'u8[16384]{0}', space=vmem, size = 0x4000, scoped, tag = 'output window, operand 0']
    %9 = vsyncpa [#allocation3], 0
    %s10 = scalar_lea.sflag [#allocation3], 1
    %11 = vsyncpa %s10, 0
    %12 = vsyncpa [#allocation4], 0
    %s13 = scalar_lea.sflag [#allocation4], 1
    %14 = vsyncpa %s13, 0
    loop: start=0, step=1, limit=4
    $region2: #{tpu_custom_call.1} parent=1 // loop_pre_header
      _
    $region3: #{tpu_custom_call.1} parent=1 // loop_header
      %s16 = sphi 0, %s20
      %p17 = scmp.ge.s32.totalorder %s16, 4
      %s23 = sphi 0, %s35
      %s24 = sphi 0, %s31
      %s25 = sphi 0, %s23
      %s26 = sphi 0, %s24
      %s27 = sphi 0, %s25
      %s28 = sphi 0, %s26
      %s48 = sphi 0, %s50
      %s51 = sphi 0, %s48
      %s52 = sphi 0, %s51
      %s68 = sphi 0, %s52
      %s76 = sphi 0, %s78
      %s79 = sphi 0, %s76
      %s80 = sphi 0, %s79
      %s96 = sphi 0, %s80
      %s100 = sphi 0, %s100
      %s102 = sphi 0, %s100
      %s103 = sphi 0, %s102
      %s117 = sphi 0, %s103
      %s121 = sphi 0, %s121
      %s123 = sphi 0, %s121
      %s124 = sphi 0, %s123
      %s138 = sphi 0, %s124
      %s146 = sphi 0, %s148
      %s149 = sphi 0, %s146
      %s150 = sphi 0, %s149
      %s166 = sphi 0, %s150
    $region4: #{tpu_custom_call.1} parent=1 // loop_header_branch
      %19 = sbr.rel (%p17) target = $region8
    $region5: #{tpu_custom_call.1} parent=1 // loop_body
      %s21 = ssub.s32 %s16, 1
      %s22 = ssub.s32 %s16, 2
      %s29 = sadd.s32 1, %s24
      %p30 = scmp.ge.s32.totalorder %s29, 1
      %s31 = scalar_select %p30, 0, %s29
      %s32 = sadd.s32 1, %s23
      %s33 = scalar_select %p30, %s32, %s23
      %p34 = scmp.ge.s32.totalorder %s33, 2
      %s35 = scalar_select %p34, 0, %s33
      %s36 = smul.u32 %s24, 8
      %s37 = ssub.s32 %s36, 1
      %p38 = scmp.gt.s32.totalorder %s37, 0
      %s39 = scalar_select %p38, %s37, 0
      %s40 = smul.u32 %s31, 8
      %s41 = ssub.s32 %s40, 1
      %p42 = scmp.gt.s32.totalorder %s41, 0
      %s43 = scalar_select %p42, %s41, 0
      %s44 = ssub.s32 %s23, %s35
      %s45 = ssub.s32 %s39, %s43
      %s46 = sor.u32 %s44, %s45
      %p47 = scmp.eq.s32.totalorder %s46, 0
      %s49 = sadd.s32 %s48, 1
      %s50 = scalar_select %p47, %s48, %s49
      %p53 = pneg %p47
      %p54 = scmp.eq.s32.totalorder %s16, 1
      %p55 = por %p53, %p54
      %p56 = scmp.ne.s32.totalorder %s48, %s51
      %p57 = scmp.eq.s32.totalorder %s16, 0
      %p58 = por %p56, %p57
      %p59 = scmp.ne.s32.totalorder %s48, %s51
      %p60 = scmp.eq.s32.totalorder %s21, 1
      %p61 = por %p59, %p60
      %p62 = scmp.ne.s32.totalorder %s51, %s52
      %p63 = scmp.eq.s32.totalorder %s21, 0
      %p64 = por %p62, %p63
      %p65 = scmp.ne.s32.totalorder %s51, %s52
      %p66 = scmp.eq.s32.totalorder %s22, 1
      %p67 = por %p65, %p66
      %p69 = scmp.ne.s32.totalorder %s52, %s68
      %p70 = scmp.eq.s32.totalorder %s22, 0
      %p71 = por %p69, %p70
      %s72 = ssub.s32 %s23, %s35
      %s73 = ssub.s32 %s24, %s31
      %s74 = sor.u32 %s72, %s73
      %p75 = scmp.eq.s32.totalorder %s74, 0
      %s77 = sadd.s32 %s76, 1
      %s78 = scalar_select %p75, %s76, %s77
      %p81 = pneg %p75
      %p82 = scmp.eq.s32.totalorder %s16, 1
      %p83 = por %p81, %p82
      %p84 = scmp.ne.s32.totalorder %s76, %s79
      %p85 = scmp.eq.s32.totalorder %s16, 0
      %p86 = por %p84, %p85
      %p87 = scmp.ne.s32.totalorder %s76, %s79
      %p88 = scmp.eq.s32.totalorder %s21, 1
      %p89 = por %p87, %p88
      %p90 = scmp.ne.s32.totalorder %s79, %s80
      %p91 = scmp.eq.s32.totalorder %s21, 0
      %p92 = por %p90, %p91
      %p93 = scmp.ne.s32.totalorder %s79, %s80
      %p94 = scmp.eq.s32.totalorder %s22, 1
      %p95 = por %p93, %p94
      %p97 = scmp.ne.s32.totalorder %s80, %s96
      %p98 = scmp.eq.s32.totalorder %s22, 0
      %p99 = por %p97, %p98
      %s101 = sadd.s32 %s100, 1
      %p104 = scmp.eq.s32.totalorder %s16, 1
      %p105 = scmp.ne.s32.totalorder %s100, %s102
      %p106 = scmp.eq.s32.totalorder %s16, 0
      %p107 = por %p105, %p106
      %p108 = scmp.ne.s32.totalorder %s100, %s102
      %p109 = scmp.eq.s32.totalorder %s21, 1
      %p110 = por %p108, %p109
      %p111 = scmp.ne.s32.totalorder %s102, %s103
      %p112 = scmp.eq.s32.totalorder %s21, 0
      %p113 = por %p111, %p112
      %p114 = scmp.ne.s32.totalorder %s102, %s103
      %p115 = scmp.eq.s32.totalorder %s22, 1
      %p116 = por %p114, %p115
      %p118 = scmp.ne.s32.totalorder %s103, %s117
      %p119 = scmp.eq.s32.totalorder %s22, 0
      %p120 = por %p118, %p119
      %s122 = sadd.s32 %s121, 1
      %p125 = scmp.eq.s32.totalorder %s16, 1
      %p126 = scmp.ne.s32.totalorder %s121, %s123
      %p127 = scmp.eq.s32.totalorder %s16, 0
      %p128 = por %p126, %p127
      %p129 = scmp.ne.s32.totalorder %s121, %s123
      %p130 = scmp.eq.s32.totalorder %s21, 1
      %p131 = por %p129, %p130
      %p132 = scmp.ne.s32.totalorder %s123, %s124
      %p133 = scmp.eq.s32.totalorder %s21, 0
      %p134 = por %p132, %p133
      %p135 = scmp.ne.s32.totalorder %s123, %s124
      %p136 = scmp.eq.s32.totalorder %s22, 1
      %p137 = por %p135, %p136
      %p139 = scmp.ne.s32.totalorder %s124, %s138
      %p140 = scmp.eq.s32.totalorder %s22, 0
      %p141 = por %p139, %p140
      %s142 = ssub.s32 %s23, %s35
      %s143 = ssub.s32 %s24, %s31
      %s144 = sor.u32 %s142, %s143
      %p145 = scmp.eq.s32.totalorder %s144, 0
      %s147 = sadd.s32 %s146, 1
      %s148 = scalar_select %p145, %s146, %s147
      %p151 = pneg %p145
      %p152 = scmp.eq.s32.totalorder %s16, 1
      %p153 = por %p151, %p152
      %p154 = scmp.ne.s32.totalorder %s146, %s149
      %p155 = scmp.eq.s32.totalorder %s16, 0
      %p156 = por %p154, %p155
      %p157 = scmp.ne.s32.totalorder %s146, %s149
      %p158 = scmp.eq.s32.totalorder %s21, 1
      %p159 = por %p157, %p158
      %p160 = scmp.ne.s32.totalorder %s149, %s150
      %p161 = scmp.eq.s32.totalorder %s21, 0
      %p162 = por %p160, %p161
      %p163 = scmp.ne.s32.totalorder %s149, %s150
      %p164 = scmp.eq.s32.totalorder %s22, 1
      %p165 = por %p163, %p164
      %p167 = scmp.ne.s32.totalorder %s150, %s166
      %p168 = scmp.eq.s32.totalorder %s22, 0
      %p169 = por %p167, %p168
      %p170 = scmp.le.s32.totalorder 1, %s16
      %p171 = scmp.lt.s32.totalorder %s16, 3
      %p172 = pnand %p170, %p171
      %p173 = pneg %p172
      // Predicated region
      $region9: #{tpu_custom_call.1} parent=5 // pred_check
        _
      $region10: #{tpu_custom_call.1} parent=5 // pred_check_branch
        %175 = sbr.rel (%p172) target = $region12
      $region11: #{tpu_custom_call.1} parent=5 // pred_region
        %s176 = ssub.s32 %s16, 1
        // Predicated region
        $region13: #{tpu_custom_call.1} parent=11 // pred_check
          %p177 = pneg %p113
        $region14: #{tpu_custom_call.1} parent=11 // pred_check_branch
          %179 = sbr.rel (%p177) target = $region16
        $region15: #{tpu_custom_call.1} parent=11 // pred_region
          _
        $region16: #{tpu_custom_call.1} parent=11 // pred_fallthru
          _
        // Predicated region
        $region17: #{tpu_custom_call.1} parent=11 // pred_check
          %p180 = pneg %p134
        $region18: #{tpu_custom_call.1} parent=11 // pred_check_branch
          %182 = sbr.rel (%p180) target = $region20
        $region19: #{tpu_custom_call.1} parent=11 // pred_region
          _
        $region20: #{tpu_custom_call.1} parent=11 // pred_fallthru
          _
      $region12: #{tpu_custom_call.1} parent=5 // pred_fallthru
        _
      %p183 = scmp.lt.s32.totalorder %s16, 2
      // Predicated region
      $region21: #{tpu_custom_call.1} parent=5 // pred_check
        %p184 = pneg %p183
      $region22: #{tpu_custom_call.1} parent=5 // pred_check_branch
        %186 = sbr.rel (%p184) target = $region24
      $region23: #{tpu_custom_call.1} parent=5 // pred_region
        // Predicated region
        $region25: #{tpu_custom_call.1} parent=23 // pred_check
          %p187 = pneg %p58
        $region26: #{tpu_custom_call.1} parent=23 // pred_check_branch
          %189 = sbr.rel (%p187) target = $region28
        $region27: #{tpu_custom_call.1} parent=23 // pred_region
          %s190 = smul.u32 %s24, 8
          %s191 = ssub.s32 %s190, 1
          %p192 = scmp.gt.s32.totalorder %s191, 0
          %s193 = scalar_select %p192, %s191, 0
          %p194 = scmp.lt.s32.totalorder %s23, 1
          %s195 = scalar_select %p194, %s23, 1
          %p196 = scmp.lt.s32.totalorder %s193, 7
          %s197 = scalar_select %p196, %s193, 7
          %s198 = smul.addr %s197, 2
          %s199 = smul.addr %s195, 16
          %s200 = sadd.s32 %s198, %s199
          %s201 = smul.addr %s200, 4
          %s202 = scalar_lea.vmem %s0, %s201
          %s203 = smul.u32 %s24, 8
          %s204 = ssub.s32 %s203, 1
          %p205 = scmp.gt.s32.totalorder %s204, 0
          %s206 = scalar_select %p205, %s204, 0
        $region28: #{tpu_custom_call.1} parent=23 // pred_fallthru
          _
        // Predicated region
        $region29: #{tpu_custom_call.1} parent=23 // pred_check
          %p207 = pneg %p86
        $region30: #{tpu_custom_call.1} parent=23 // pred_check_branch
          %209 = sbr.rel (%p207) target = $region32
        $region31: #{tpu_custom_call.1} parent=23 // pred_region
          %s210 = sand.u32 %s76, 1
          %s211 = scalar_lea.sflag [#allocation3], %s210
          %s212 = sand.u32 %s76, 1
          %s213 = smul.addr %s212, 64
          %s214 = scalar_lea.vmem [#allocation2], %s213
          %s215 = smul.u32 8, %s24
          %s217 = ssub.s32 1024, 1024
          %218 = vsyncadd %s211, %s217
          %s219 = smul.addr %s215, 2
          %s220 = smul.addr %s23, 16
          %s221 = sadd.s32 %s219, %s220
          %s222 = smul.addr %s221, 64
          %s223 = scalar_lea.hbm %s1, %s222
          %s224 = sshll.u32 %s214, 4
          %s225 = int_to_ptr.vmem [resolvable:$true] %s224
          %230 = dma.hbm_to_vmem [thread:$0]  %s223, 1024, %s225, %s211, 128, 128, 8
        $region32: #{tpu_custom_call.1} parent=23 // pred_fallthru
          _
      $region24: #{tpu_custom_call.1} parent=5 // pred_fallthru
        _
      %p231 = scmp.le.s32.totalorder 1, %s16
      %p232 = scmp.lt.s32.totalorder %s16, 3
      %p233 = pnand %p231, %p232
      %p234 = pneg %p233
      // Predicated region
      $region33: #{tpu_custom_call.1} parent=5 // pred_check
        _
      $region34: #{tpu_custom_call.1} parent=5 // pred_check_branch
        %236 = sbr.rel (%p233) target = $region36
      $region35: #{tpu_custom_call.1} parent=5 // pred_region
        %s237 = ssub.s32 %s16, 1
        %s238 = sand.u32 %s79, 1
        %s239 = scalar_lea.sflag [#allocation3], %s238
        %s240 = sand.u32 %s79, 1
        %s241 = smul.addr %s240, 64
        %s242 = scalar_lea.vmem [#allocation2], %s241
        // Predicated region
        $region37: #{tpu_custom_call.1} parent=35 // pred_check
          %p243 = pneg %p92
        $region38: #{tpu_custom_call.1} parent=35 // pred_check_branch
          %245 = sbr.rel (%p243) target = $region40
        $region39: #{tpu_custom_call.1} parent=35 // pred_region
          %246 = dma.done %s239, 1024
        $region40: #{tpu_custom_call.1} parent=35 // pred_fallthru
          _
        %s247 = smul.u32 %s26, 8
        %s248 = ssub.s32 %s247, 1
        %p249 = scmp.gt.s32.totalorder %s248, 0
        %s250 = scalar_select %p249, %s248, 0
        %p251 = scmp.lt.s32.totalorder %s25, 1
        %s252 = scalar_select %p251, %s25, 1
        %p253 = scmp.lt.s32.totalorder %s250, 7
        %s254 = scalar_select %p253, %s250, 7
        %s255 = smul.addr %s254, 2
        %s256 = smul.addr %s252, 16
        %s257 = sadd.s32 %s255, %s256
        %s258 = smul.addr %s257, 4
        %s259 = scalar_lea.vmem %s0, %s258
        %p260 = pneg %p64
        %p261 = pneg %p61
        %s262 = sand.u32 %s79, 1
        %s263 = scalar_lea.sflag [#allocation3], %s262
        %s264 = sand.u32 %s79, 1
        %s265 = smul.addr %s264, 64
        %s266 = scalar_lea.vmem [#allocation2], %s265
        %p267 = pneg %p92
        %p268 = pneg %p89
        %p269 = pneg %p113
        %p270 = pneg %p110
        %p271 = pneg %p134
        %p272 = pneg %p131
        %p273 = pneg %p162
        %p274 = pneg %p159
        %s275 = sand.u32 %s149, 1
        %s276 = scalar_lea.sflag [#allocation4], %s275
        %s277 = sand.u32 %s149, 1
        %s278 = smul.addr %s277, 16
        %s279 = scalar_lea.vmem [#allocation5], %s278
        %s280 = smul.u32 %s26, 8
        %s281 = ssub.s32 %s280, 1
        %p282 = scmp.gt.s32.totalorder %s281, 0
        %s283 = scalar_select %p282, %s281, 0
        %p284 = scmp.lt.s32.totalorder %s25, 1
        %s285 = scalar_select %p284, %s25, 1
        %p286 = scmp.lt.s32.totalorder %s283, 7
        %s287 = scalar_select %p286, %s283, 7
        %s288 = smul.addr %s287, 2
        %s289 = smul.addr %s285, 16
        %s290 = sadd.s32 %s288, %s289
        %s291 = smul.addr %s290, 4
        %s292 = scalar_lea.vmem %s0, %s291
        %s293 = smul.u32 %s26, 8
        %s294 = ssub.s32 %s293, 1
        %p295 = scmp.gt.s32.totalorder %s294, 0
        %s296 = scalar_select %p295, %s294, 0
        %s297 = smul.u32 8, %s26
        %s298 = smul.u32 4, %s26
        %v300 = vld [vmem:[%s2] sm:$0xf]
        %v301 = vld [vmem:[%s2 + $0x4] sm:$0xf]
        %v302 = vld [vmem:[%s2 + $0x8] sm:$0xf]
        %v303 = vld [vmem:[%s2 + $0xc] sm:$0xf]
        %v304 = vld [vmem:[%s2 + $0x10] sm:$0xf]
        %v305 = vld [vmem:[%s2 + $0x14] sm:$0xf]
        %v306 = vld [vmem:[%s2 + $0x18] sm:$0xf]
        %v307 = vld [vmem:[%s2 + $0x1c] sm:$0xf]
        %v308 = vld [vmem:[%s2 + $0x20] sm:$0xf]
        %v309 = vld [vmem:[%s2 + $0x24] sm:$0xf]
        %v310 = vld [vmem:[%s2 + $0x28] sm:$0xf]
        %v311 = vld [vmem:[%s2 + $0x2c] sm:$0xf]
        %v312 = vld [vmem:[%s2 + $0x30] sm:$0xf]
        %v313 = vld [vmem:[%s2 + $0x34] sm:$0xf]
        %v314 = vld [vmem:[%s2 + $0x38] sm:$0xf]
        %v315 = vld [vmem:[%s2 + $0x3c] sm:$0xf]
        %v316 = vld [vmem:[%s2 + $0x40] sm:$0xf]
        %v317 = vld [vmem:[%s2 + $0x44] sm:$0xf]
        %v318 = vld [vmem:[%s2 + $0x48] sm:$0x3]
        %v319 = vld [vmem:[%s3] sm:$0x1]
        %v320 = vld [vmem:[%s292] sm:$0xff]
        %v322 = vlaneseq
        %v323 = vshrl.u32 %v322, 7
        %v324 = vsub.s32 0, %v323
        %v325 = vrot.slane %v319, %v324
        %v328 = vunpack.c.l.b16 %v320
        %v329 = vunpack.c.h.b16 %v320
        %v330 = vpack.c.b16 %v328, %v328
        %v331 = vpack.c.b16 %v329, %v329
        %v352 = vunpack.c.l.b16 %v300
        %v353 = vunpack.c.l.b16 %v301
        %v354 = vunpack.c.l.b16 %v302
        %v355 = vunpack.c.l.b16 %v303
        %v356 = vunpack.c.l.b16 %v304
        %v357 = vunpack.c.l.b16 %v305
        %v358 = vunpack.c.l.b16 %v306
        %v359 = vunpack.c.l.b16 %v307
        %v360 = vunpack.c.l.b16 %v308
        %v361 = vunpack.c.l.b16 %v309
        %v362 = vunpack.c.l.b16 %v310
        %v363 = vunpack.c.l.b16 %v311
        %v364 = vunpack.c.l.b16 %v312
        %v365 = vunpack.c.l.b16 %v313
        %v366 = vunpack.c.l.b16 %v314
        %v367 = vunpack.c.l.b16 %v315
        %v368 = vunpack.c.l.b16 %v316
        %v369 = vunpack.c.l.b16 %v317
        %v370 = vunpack.c.l.b16 %v318
        %v371 = vpack.c.b16 %v353, %v352
        %v372 = vpack.c.b16 %v355, %v354
        %v373 = vpack.c.b16 %v357, %v356
        %v374 = vpack.c.b16 %v359, %v358
        %v375 = vpack.c.b16 %v361, %v360
        %v376 = vpack.c.b16 %v363, %v362
        %v377 = vpack.c.b16 %v365, %v364
        %v378 = vpack.c.b16 %v367, %v366
        %v379 = vpack.c.b16 %v369, %v368
        %v380 = vpack.c.b16 %v370, %v370
        %vm390 = vcmask 154624
        %v392 = vsel %vm390, %v331, 0
        %vm394 = vcmask 1040384
        %vm395 = vcmask 1041408
        %v396 = vsel %vm394, 4294967295, 65535
        %v397 = vsel %vm395, %v396, 0
        %v399 = vand.u32 %v380, %v397
        %401 = vmatprep.subr.bf16.mxu0 0
        %402 = vmatpush1.bf16.msra.mxu0 %v371
        %403 = vmatprep.subr.bf16.mxu0 0
        %404 = vmatpush1.bf16.msra.mxu0 %v372
        %405 = vmatprep.subr.bf16.mxu0 0
        %406 = vmatpush1.bf16.msra.mxu0 %v373
        %407 = vmatprep.subr.bf16.mxu0 0
        %408 = vmatpush1.bf16.msra.mxu0 %v374
        %409 = vmatprep.subr.bf16.mxu0 0
        %410 = vmatpush1.bf16.msra.mxu0 %v375
        %411 = vmatprep.subr.bf16.mxu0 0
        %412 = vmatpush1.bf16.msra.mxu0 %v376
        %413 = vmatprep.subr.bf16.mxu0 0
        %414 = vmatpush1.bf16.msra.mxu0 %v377
        %415 = vmatprep.subr.bf16.mxu0 0
        %416 = vmatpush1.bf16.msra.mxu0 %v378
        %417 = vmatprep.subr.bf16.mxu0 0
        %418 = vmatpush1.bf16.msra.mxu0 %v379
        %419 = vmatprep.subr.bf16.mxu0 0
        %420 = vmatpush1.bf16.msra.mxu0 %v399
        %421 = vmatprep.subr.bf16.mxu0 0
        %422 = vmatpush1.bf16.msra.mxu0 0
        %423 = vmatprep.subr.bf16.mxu0 0
        %424 = vmatpush1.bf16.msra.mxu0 0
        %425 = vmatprep.subr.bf16.mxu0 0
        %426 = vmatpush1.bf16.msra.mxu0 0
        %427 = vmatprep.subr.bf16.mxu0 0
        %428 = vmatpush1.bf16.msra.mxu0 0
        %429 = vmatprep.subr.bf16.mxu0 0
        %430 = vmatpush1.bf16.msra.mxu0 0
        %431 = vmatprep.subr.bf16.mxu0 0
        %432 = vmatpush1.bf16.msra.mxu0 0
        %433 = vmatprep.mubr.bf16.mxu0 %v392
        %434 = vmatmul.mubr.bf16.gmra.mrb[0].mxu0 %v330
        %v435 = vpop.f32.mrb[0].mxu0
        %v436 = vadd.f32 %v325, %v435
        %v437 = vpop.f32.mrb[0].mxu0
        %v438 = vpop.f32.mrb[0].mxu0
        %v439 = vpop.f32.mrb[0].mxu0
        %440 = vdwg.mxu0
        %v441 = vmax.f32 %v436, 0.0
        %v443 = vrot.slane %v441, 4
        %v445 = vmax.f32 %v441, %v443
        %v446 = vrot.slane %v441, 3
        %v448 = vsel %vm394, %v443, %v446
        %v449 = vmax.f32 %v445, %v448
        %v450 = vld [vmem:[%s242] sm:$0xff]
        %v452 = vunpack.c.l.b16 %v450
        %v453 = vunpack.c.h.b16 %v450
        %v454 = vpack.c.b16 %v452, %v452
        %v455 = vpack.c.b16 %v453, %v453
        %v458 = vsel %vm390, %v455, 0
        %460 = vmatprep.subr.bf16.mxu0 0
        %461 = vmatpush1.bf16.msra.mxu0 %v371
        %462 = vmatprep.subr.bf16.mxu0 0
        %463 = vmatpush1.bf16.msra.mxu0 %v372
        %464 = vmatprep.subr.bf16.mxu0 0
        %465 = vmatpush1.bf16.msra.mxu0 %v373
        %466 = vmatprep.subr.bf16.mxu0 0
        %467 = vmatpush1.bf16.msra.mxu0 %v374
        %468 = vmatprep.subr.bf16.mxu0 0
        %469 = vmatpush1.bf16.msra.mxu0 %v375
        %470 = vmatprep.subr.bf16.mxu0 0
        %471 = vmatpush1.bf16.msra.mxu0 %v376
        %472 = vmatprep.subr.bf16.mxu0 0
        %473 = vmatpush1.bf16.msra.mxu0 %v377
        %474 = vmatprep.subr.bf16.mxu0 0
        %475 = vmatpush1.bf16.msra.mxu0 %v378
        %476 = vmatprep.subr.bf16.mxu0 0
        %477 = vmatpush1.bf16.msra.mxu0 %v379
        %478 = vmatprep.subr.bf16.mxu0 0
        %479 = vmatpush1.bf16.msra.mxu0 %v399
        %480 = vmatprep.subr.bf16.mxu0 0
        %481 = vmatpush1.bf16.msra.mxu0 0
        %482 = vmatprep.subr.bf16.mxu0 0
        %483 = vmatpush1.bf16.msra.mxu0 0
        %484 = vmatprep.subr.bf16.mxu0 0
        %485 = vmatpush1.bf16.msra.mxu0 0
        %486 = vmatprep.subr.bf16.mxu0 0
        %487 = vmatpush1.bf16.msra.mxu0 0
        %488 = vmatprep.subr.bf16.mxu0 0
        %489 = vmatpush1.bf16.msra.mxu0 0
        %490 = vmatprep.subr.bf16.mxu0 0
        %491 = vmatpush1.bf16.msra.mxu0 0
        %492 = vmatprep.mubr.bf16.mxu0 %v458
        %493 = vmatmul.mubr.bf16.gmra.mrb[0].mxu0 %v454
        %v494 = vpop.f32.mrb[0].mxu0
        %v495 = vadd.f32 %v325, %v494
        %v496 = vpop.f32.mrb[0].mxu0
        %v497 = vpop.f32.mrb[0].mxu0
        %v498 = vpop.f32.mrb[0].mxu0
        %499 = vdwg.mxu0
        %v500 = vmax.f32 %v495, 0.0
        %v502 = vrot.slane %v500, 4
        %v504 = vmax.f32 %v500, %v502
        %v505 = vrot.slane %v500, 3
        %v507 = vsel %vm394, %v502, %v505
        %v508 = vmax.f32 %v504, %v507
        %s509 = scalar_lea.vmem %s242, 8 [#allocation2]
        %v510 = vld [vmem:[%s509] sm:$0xff]
        %v512 = vunpack.c.l.b16 %v510
        %v513 = vunpack.c.h.b16 %v510
        %v514 = vpack.c.b16 %v512, %v512
        %v515 = vpack.c.b16 %v513, %v513
        %v518 = vsel %vm390, %v515, 0
        %520 = vmatprep.subr.bf16.mxu0 0
        %521 = vmatpush1.bf16.msra.mxu0 %v371
        %522 = vmatprep.subr.bf16.mxu0 0
        %523 = vmatpush1.bf16.msra.mxu0 %v372
        %524 = vmatprep.subr.bf16.mxu0 0
        %525 = vmatpush1.bf16.msra.mxu0 %v373
        %526 = vmatprep.subr.bf16.mxu0 0
        %527 = vmatpush1.bf16.msra.mxu0 %v374
        %528 = vmatprep.subr.bf16.mxu0 0
        %529 = vmatpush1.bf16.msra.mxu0 %v375
        %530 = vmatprep.subr.bf16.mxu0 0
        %531 = vmatpush1.bf16.msra.mxu0 %v376
        %532 = vmatprep.subr.bf16.mxu0 0
        %533 = vmatpush1.bf16.msra.mxu0 %v377
        %534 = vmatprep.subr.bf16.mxu0 0
        %535 = vmatpush1.bf16.msra.mxu0 %v378
        %536 = vmatprep.subr.bf16.mxu0 0
        %537 = vmatpush1.bf16.msra.mxu0 %v379
        %538 = vmatprep.subr.bf16.mxu0 0
        %539 = vmatpush1.bf16.msra.mxu0 %v399
        %540 = vmatprep.subr.bf16.mxu0 0
        %541 = vmatpush1.bf16.msra.mxu0 0
        %542 = vmatprep.subr.bf16.mxu0 0
        %543 = vmatpush1.bf16.msra.mxu0 0
        %544 = vmatprep.subr.bf16.mxu0 0
        %545 = vmatpush1.bf16.msra.mxu0 0
        %546 = vmatprep.subr.bf16.mxu0 0
        %547 = vmatpush1.bf16.msra.mxu0 0
        %548 = vmatprep.subr.bf16.mxu0 0
        %549 = vmatpush1.bf16.msra.mxu0 0
        %550 = vmatprep.subr.bf16.mxu0 0
        %551 = vmatpush1.bf16.msra.mxu0 0
        %552 = vmatprep.mubr.bf16.mxu0 %v518
        %553 = vmatmul.mubr.bf16.gmra.mrb[0].mxu0 %v514
        %v554 = vpop.f32.mrb[0].mxu0
        %v555 = vadd.f32 %v325, %v554
        %v556 = vpop.f32.mrb[0].mxu0
        %v557 = vpop.f32.mrb[0].mxu0
        %v558 = vpop.f32.mrb[0].mxu0
        %559 = vdwg.mxu0
        %v560 = vmax.f32 %v555, 0.0
        %v562 = vrot.slane %v560, 4
        %v564 = vmax.f32 %v560, %v562
        %v565 = vrot.slane %v560, 3
        %v567 = vsel %vm394, %v562, %v565
        %v568 = vmax.f32 %v564, %v567
        %s569 = scalar_lea.vmem %s242, 16 [#allocation2]
        %v570 = vld [vmem:[%s569] sm:$0xff]
        %v572 = vunpack.c.l.b16 %v570
        %v573 = vunpack.c.h.b16 %v570
        %v574 = vpack.c.b16 %v572, %v572
        %v575 = vpack.c.b16 %v573, %v573
        %v578 = vsel %vm390, %v575, 0
        %580 = vmatprep.subr.bf16.mxu0 0
        %581 = vmatpush1.bf16.msra.mxu0 %v371
        %582 = vmatprep.subr.bf16.mxu0 0
        %583 = vmatpush1.bf16.msra.mxu0 %v372
        %584 = vmatprep.subr.bf16.mxu0 0
        %585 = vmatpush1.bf16.msra.mxu0 %v373
        %586 = vmatprep.subr.bf16.mxu0 0
        %587 = vmatpush1.bf16.msra.mxu0 %v374
        %588 = vmatprep.subr.bf16.mxu0 0
        %589 = vmatpush1.bf16.msra.mxu0 %v375
        %590 = vmatprep.subr.bf16.mxu0 0
        %591 = vmatpush1.bf16.msra.mxu0 %v376
        %592 = vmatprep.subr.bf16.mxu0 0
        %593 = vmatpush1.bf16.msra.mxu0 %v377
        %594 = vmatprep.subr.bf16.mxu0 0
        %595 = vmatpush1.bf16.msra.mxu0 %v378
        %596 = vmatprep.subr.bf16.mxu0 0
        %597 = vmatpush1.bf16.msra.mxu0 %v379
        %598 = vmatprep.subr.bf16.mxu0 0
        %599 = vmatpush1.bf16.msra.mxu0 %v399
        %600 = vmatprep.subr.bf16.mxu0 0
        %601 = vmatpush1.bf16.msra.mxu0 0
        %602 = vmatprep.subr.bf16.mxu0 0
        %603 = vmatpush1.bf16.msra.mxu0 0
        %604 = vmatprep.subr.bf16.mxu0 0
        %605 = vmatpush1.bf16.msra.mxu0 0
        %606 = vmatprep.subr.bf16.mxu0 0
        %607 = vmatpush1.bf16.msra.mxu0 0
        %608 = vmatprep.subr.bf16.mxu0 0
        %609 = vmatpush1.bf16.msra.mxu0 0
        %610 = vmatprep.subr.bf16.mxu0 0
        %611 = vmatpush1.bf16.msra.mxu0 0
        %612 = vmatprep.mubr.bf16.mxu0 %v578
        %613 = vmatmul.mubr.bf16.gmra.mrb[0].mxu0 %v574
        %v614 = vpop.f32.mrb[0].mxu0
        %v615 = vadd.f32 %v325, %v614
        %v616 = vpop.f32.mrb[0].mxu0
        %v617 = vpop.f32.mrb[0].mxu0
        %v618 = vpop.f32.mrb[0].mxu0
        %619 = vdwg.mxu0
        %v620 = vmax.f32 %v615, 0.0
        %v622 = vrot.slane %v620, 4
        %v624 = vmax.f32 %v620, %v622
        %v625 = vrot.slane %v620, 3
        %v627 = vsel %vm394, %v622, %v625
        %v628 = vmax.f32 %v624, %v627
        %s629 = scalar_lea.vmem %s242, 24 [#allocation2]
        %v630 = vld [vmem:[%s629] sm:$0xff]
        %v632 = vunpack.c.l.b16 %v630
        %v633 = vunpack.c.h.b16 %v630
        %v634 = vpack.c.b16 %v632, %v632
        %v635 = vpack.c.b16 %v633, %v633
        %v638 = vsel %vm390, %v635, 0
        %640 = vmatprep.subr.bf16.mxu0 0
        %641 = vmatpush1.bf16.msra.mxu0 %v371
        %642 = vmatprep.subr.bf16.mxu0 0
        %643 = vmatpush1.bf16.msra.mxu0 %v372
        %644 = vmatprep.subr.bf16.mxu0 0
        %645 = vmatpush1.bf16.msra.mxu0 %v373
        %646 = vmatprep.subr.bf16.mxu0 0
        %647 = vmatpush1.bf16.msra.mxu0 %v374
        %648 = vmatprep.subr.bf16.mxu0 0
        %649 = vmatpush1.bf16.msra.mxu0 %v375
        %650 = vmatprep.subr.bf16.mxu0 0
        %651 = vmatpush1.bf16.msra.mxu0 %v376
        %652 = vmatprep.subr.bf16.mxu0 0
        %653 = vmatpush1.bf16.msra.mxu0 %v377
        %654 = vmatprep.subr.bf16.mxu0 0
        %655 = vmatpush1.bf16.msra.mxu0 %v378
        %656 = vmatprep.subr.bf16.mxu0 0
        %657 = vmatpush1.bf16.msra.mxu0 %v379
        %658 = vmatprep.subr.bf16.mxu0 0
        %659 = vmatpush1.bf16.msra.mxu0 %v399
        %660 = vmatprep.subr.bf16.mxu0 0
        %661 = vmatpush1.bf16.msra.mxu0 0
        %662 = vmatprep.subr.bf16.mxu0 0
        %663 = vmatpush1.bf16.msra.mxu0 0
        %664 = vmatprep.subr.bf16.mxu0 0
        %665 = vmatpush1.bf16.msra.mxu0 0
        %666 = vmatprep.subr.bf16.mxu0 0
        %667 = vmatpush1.bf16.msra.mxu0 0
        %668 = vmatprep.subr.bf16.mxu0 0
        %669 = vmatpush1.bf16.msra.mxu0 0
        %670 = vmatprep.subr.bf16.mxu0 0
        %671 = vmatpush1.bf16.msra.mxu0 0
        %672 = vmatprep.mubr.bf16.mxu0 %v638
        %673 = vmatmul.mubr.bf16.gmra.mrb[0].mxu0 %v634
        %v674 = vpop.f32.mrb[0].mxu0
        %v675 = vadd.f32 %v325, %v674
        %v676 = vpop.f32.mrb[0].mxu0
        %v677 = vpop.f32.mrb[0].mxu0
        %v678 = vpop.f32.mrb[0].mxu0
        %679 = vdwg.mxu0
        %v680 = vmax.f32 %v675, 0.0
        %v682 = vrot.slane %v680, 4
        %v684 = vmax.f32 %v680, %v682
        %v685 = vrot.slane %v680, 3
        %v687 = vsel %vm394, %v682, %v685
        %v688 = vmax.f32 %v684, %v687
        %s689 = scalar_lea.vmem %s242, 32 [#allocation2]
        %v690 = vld [vmem:[%s689] sm:$0xff]
        %v692 = vunpack.c.l.b16 %v690
        %v693 = vunpack.c.h.b16 %v690
        %v694 = vpack.c.b16 %v692, %v692
        %v695 = vpack.c.b16 %v693, %v693
        %v698 = vsel %vm390, %v695, 0
        %700 = vmatprep.subr.bf16.mxu0 0
        %701 = vmatpush1.bf16.msra.mxu0 %v371
        %702 = vmatprep.subr.bf16.mxu0 0
        %703 = vmatpush1.bf16.msra.mxu0 %v372
        %704 = vmatprep.subr.bf16.mxu0 0
        %705 = vmatpush1.bf16.msra.mxu0 %v373
        %706 = vmatprep.subr.bf16.mxu0 0
        %707 = vmatpush1.bf16.msra.mxu0 %v374
        %708 = vmatprep.subr.bf16.mxu0 0
        %709 = vmatpush1.bf16.msra.mxu0 %v375
        %710 = vmatprep.subr.bf16.mxu0 0
        %711 = vmatpush1.bf16.msra.mxu0 %v376
        %712 = vmatprep.subr.bf16.mxu0 0
        %713 = vmatpush1.bf16.msra.mxu0 %v377
        %714 = vmatprep.subr.bf16.mxu0 0
        %715 = vmatpush1.bf16.msra.mxu0 %v378
        %716 = vmatprep.subr.bf16.mxu0 0
        %717 = vmatpush1.bf16.msra.mxu0 %v379
        %718 = vmatprep.subr.bf16.mxu0 0
        %719 = vmatpush1.bf16.msra.mxu0 %v399
        %720 = vmatprep.subr.bf16.mxu0 0
        %721 = vmatpush1.bf16.msra.mxu0 0
        %722 = vmatprep.subr.bf16.mxu0 0
        %723 = vmatpush1.bf16.msra.mxu0 0
        %724 = vmatprep.subr.bf16.mxu0 0
        %725 = vmatpush1.bf16.msra.mxu0 0
        %726 = vmatprep.subr.bf16.mxu0 0
        %727 = vmatpush1.bf16.msra.mxu0 0
        %728 = vmatprep.subr.bf16.mxu0 0
        %729 = vmatpush1.bf16.msra.mxu0 0
        %730 = vmatprep.subr.bf16.mxu0 0
        %731 = vmatpush1.bf16.msra.mxu0 0
        %732 = vmatprep.mubr.bf16.mxu0 %v698
        %733 = vmatmul.mubr.bf16.gmra.mrb[0].mxu0 %v694
        %v734 = vpop.f32.mrb[0].mxu0
        %v735 = vadd.f32 %v325, %v734
        %v736 = vpop.f32.mrb[0].mxu0
        %v737 = vpop.f32.mrb[0].mxu0
        %v738 = vpop.f32.mrb[0].mxu0
        %739 = vdwg.mxu0
        %v740 = vmax.f32 %v735, 0.0
        %v742 = vrot.slane %v740, 4
        %v744 = vmax.f32 %v740, %v742
        %v745 = vrot.slane %v740, 3
        %v747 = vsel %vm394, %v742, %v745
        %v748 = vmax.f32 %v744, %v747
        %s749 = scalar_lea.vmem %s242, 40 [#allocation2]
        %v750 = vld [vmem:[%s749] sm:$0xff]
        %v752 = vunpack.c.l.b16 %v750
        %v753 = vunpack.c.h.b16 %v750
        %v754 = vpack.c.b16 %v752, %v752
        %v755 = vpack.c.b16 %v753, %v753
        %v758 = vsel %vm390, %v755, 0
        %760 = vmatprep.subr.bf16.mxu0 0
        %761 = vmatpush1.bf16.msra.mxu0 %v371
        %762 = vmatprep.subr.bf16.mxu0 0
        %763 = vmatpush1.bf16.msra.mxu0 %v372
        %764 = vmatprep.subr.bf16.mxu0 0
        %765 = vmatpush1.bf16.msra.mxu0 %v373
        %766 = vmatprep.subr.bf16.mxu0 0
        %767 = vmatpush1.bf16.msra.mxu0 %v374
        %768 = vmatprep.subr.bf16.mxu0 0
        %769 = vmatpush1.bf16.msra.mxu0 %v375
        %770 = vmatprep.subr.bf16.mxu0 0
        %771 = vmatpush1.bf16.msra.mxu0 %v376
        %772 = vmatprep.subr.bf16.mxu0 0
        %773 = vmatpush1.bf16.msra.mxu0 %v377
        %774 = vmatprep.subr.bf16.mxu0 0
        %775 = vmatpush1.bf16.msra.mxu0 %v378
        %776 = vmatprep.subr.bf16.mxu0 0
        %777 = vmatpush1.bf16.msra.mxu0 %v379
        %778 = vmatprep.subr.bf16.mxu0 0
        %779 = vmatpush1.bf16.msra.mxu0 %v399
        %780 = vmatprep.subr.bf16.mxu0 0
        %781 = vmatpush1.bf16.msra.mxu0 0
        %782 = vmatprep.subr.bf16.mxu0 0
        %783 = vmatpush1.bf16.msra.mxu0 0
        %784 = vmatprep.subr.bf16.mxu0 0
        %785 = vmatpush1.bf16.msra.mxu0 0
        %786 = vmatprep.subr.bf16.mxu0 0
        %787 = vmatpush1.bf16.msra.mxu0 0
        %788 = vmatprep.subr.bf16.mxu0 0
        %789 = vmatpush1.bf16.msra.mxu0 0
        %790 = vmatprep.subr.bf16.mxu0 0
        %791 = vmatpush1.bf16.msra.mxu0 0
        %792 = vmatprep.mubr.bf16.mxu0 %v758
        %793 = vmatmul.mubr.bf16.gmra.mrb[0].mxu0 %v754
        %v794 = vpop.f32.mrb[0].mxu0
        %v795 = vadd.f32 %v325, %v794
        %v796 = vpop.f32.mrb[0].mxu0
        %v797 = vpop.f32.mrb[0].mxu0
        %v798 = vpop.f32.mrb[0].mxu0
        %799 = vdwg.mxu0
        %v800 = vmax.f32 %v795, 0.0
        %v802 = vrot.slane %v800, 4
        %v804 = vmax.f32 %v800, %v802
        %v805 = vrot.slane %v800, 3
        %v807 = vsel %vm394, %v802, %v805
        %v808 = vmax.f32 %v804, %v807
        %s809 = scalar_lea.vmem %s242, 48 [#allocation2]
        %v810 = vld [vmem:[%s809] sm:$0xff]
        %v812 = vunpack.c.l.b16 %v810
        %v813 = vunpack.c.h.b16 %v810
        %v814 = vpack.c.b16 %v812, %v812
        %v815 = vpack.c.b16 %v813, %v813
        %v818 = vsel %vm390, %v815, 0
        %820 = vmatprep.subr.bf16.mxu0 0
        %821 = vmatpush1.bf16.msra.mxu0 %v371
        %822 = vmatprep.subr.bf16.mxu0 0
        %823 = vmatpush1.bf16.msra.mxu0 %v372
        %824 = vmatprep.subr.bf16.mxu0 0
        %825 = vmatpush1.bf16.msra.mxu0 %v373
        %826 = vmatprep.subr.bf16.mxu0 0
        %827 = vmatpush1.bf16.msra.mxu0 %v374
        %828 = vmatprep.subr.bf16.mxu0 0
        %829 = vmatpush1.bf16.msra.mxu0 %v375
        %830 = vmatprep.subr.bf16.mxu0 0
        %831 = vmatpush1.bf16.msra.mxu0 %v376
        %832 = vmatprep.subr.bf16.mxu0 0
        %833 = vmatpush1.bf16.msra.mxu0 %v377
        %834 = vmatprep.subr.bf16.mxu0 0
        %835 = vmatpush1.bf16.msra.mxu0 %v378
        %836 = vmatprep.subr.bf16.mxu0 0
        %837 = vmatpush1.bf16.msra.mxu0 %v379
        %838 = vmatprep.subr.bf16.mxu0 0
        %839 = vmatpush1.bf16.msra.mxu0 %v399
        %840 = vmatprep.subr.bf16.mxu0 0
        %841 = vmatpush1.bf16.msra.mxu0 0
        %842 = vmatprep.subr.bf16.mxu0 0
        %843 = vmatpush1.bf16.msra.mxu0 0
        %844 = vmatprep.subr.bf16.mxu0 0
        %845 = vmatpush1.bf16.msra.mxu0 0
        %846 = vmatprep.subr.bf16.mxu0 0
        %847 = vmatpush1.bf16.msra.mxu0 0
        %848 = vmatprep.subr.bf16.mxu0 0
        %849 = vmatpush1.bf16.msra.mxu0 0
        %850 = vmatprep.subr.bf16.mxu0 0
        %851 = vmatpush1.bf16.msra.mxu0 0
        %852 = vmatprep.mubr.bf16.mxu0 %v818
        %853 = vmatmul.mubr.bf16.gmra.mrb[0].mxu0 %v814
        %v854 = vpop.f32.mrb[0].mxu0
        %v855 = vadd.f32 %v325, %v854
        %v856 = vpop.f32.mrb[0].mxu0
        %v857 = vpop.f32.mrb[0].mxu0
        %v858 = vpop.f32.mrb[0].mxu0
        %859 = vdwg.mxu0
        %v860 = vmax.f32 %v855, 0.0
        %v862 = vrot.slane %v860, 4
        %v864 = vmax.f32 %v860, %v862
        %v865 = vrot.slane %v860, 3
        %v867 = vsel %vm394, %v862, %v865
        %v868 = vmax.f32 %v864, %v867
        %s869 = scalar_lea.vmem %s242, 56 [#allocation2]
        %v870 = vld [vmem:[%s869] sm:$0xff]
        %v872 = vunpack.c.l.b16 %v870
        %v873 = vunpack.c.h.b16 %v870
        %v874 = vpack.c.b16 %v872, %v872
        %v875 = vpack.c.b16 %v873, %v873
        %v878 = vsel %vm390, %v875, 0
        %880 = vmatprep.subr.bf16.mxu0 0
        %881 = vmatpush1.bf16.msra.mxu0 %v371
        %882 = vmatprep.subr.bf16.mxu0 0
        %883 = vmatpush1.bf16.msra.mxu0 %v372
        %884 = vmatprep.subr.bf16.mxu0 0
        %885 = vmatpush1.bf16.msra.mxu0 %v373
        %886 = vmatprep.subr.bf16.mxu0 0
        %887 = vmatpush1.bf16.msra.mxu0 %v374
        %888 = vmatprep.subr.bf16.mxu0 0
        %889 = vmatpush1.bf16.msra.mxu0 %v375
        %890 = vmatprep.subr.bf16.mxu0 0
        %891 = vmatpush1.bf16.msra.mxu0 %v376
        %892 = vmatprep.subr.bf16.mxu0 0
        %893 = vmatpush1.bf16.msra.mxu0 %v377
        %894 = vmatprep.subr.bf16.mxu0 0
        %895 = vmatpush1.bf16.msra.mxu0 %v378
        %896 = vmatprep.subr.bf16.mxu0 0
        %897 = vmatpush1.bf16.msra.mxu0 %v379
        %898 = vmatprep.subr.bf16.mxu0 0
        %899 = vmatpush1.bf16.msra.mxu0 %v399
        %900 = vmatprep.subr.bf16.mxu0 0
        %901 = vmatpush1.bf16.msra.mxu0 0
        %902 = vmatprep.subr.bf16.mxu0 0
        %903 = vmatpush1.bf16.msra.mxu0 0
        %904 = vmatprep.subr.bf16.mxu0 0
        %905 = vmatpush1.bf16.msra.mxu0 0
        %906 = vmatprep.subr.bf16.mxu0 0
        %907 = vmatpush1.bf16.msra.mxu0 0
        %908 = vmatprep.subr.bf16.mxu0 0
        %909 = vmatpush1.bf16.msra.mxu0 0
        %910 = vmatprep.subr.bf16.mxu0 0
        %911 = vmatpush1.bf16.msra.mxu0 0
        %912 = vmatprep.mubr.bf16.mxu0 %v878
        %913 = vmatmul.mubr.bf16.gmra.mrb[0].mxu0 %v874
        %v914 = vpop.f32.mrb[0].mxu0
        %v915 = vadd.f32 %v325, %v914
        %v916 = vpop.f32.mrb[0].mxu0
        %v917 = vpop.f32.mrb[0].mxu0
        %v918 = vpop.f32.mrb[0].mxu0
        %919 = vdwg.mxu0
        %v920 = vmax.f32 %v915, 0.0
        %v922 = vrot.slane %v920, 4
        %v924 = vmax.f32 %v920, %v922
        %v925 = vrot.slane %v920, 3
        %v927 = vsel %vm394, %v922, %v925
        %v928 = vmax.f32 %v924, %v927
        %v929 = vmax.f32 %v449, %v508
        %v930 = vmax.f32 %v929, %v568
        %vm931 = vcmask 519168
        %932 = vst.msk [vmem:[%s279] sm:$0xf] %vm931, %v930
        %v933 = vmax.f32 %v568, %v628
        %v934 = vmax.f32 %v933, %v688
        %s935 = scalar_lea.vmem %s279, 4 [#allocation5]
        %936 = vst.msk [vmem:[%s935] sm:$0xf] %vm931, %v934
        %v937 = vmax.f32 %v688, %v748
        %v938 = vmax.f32 %v937, %v808
        %s939 = scalar_lea.vmem %s279, 8 [#allocation5]
        %940 = vst.msk [vmem:[%s939] sm:$0xf] %vm931, %v938
        %v941 = vmax.f32 %v808, %v868
        %v942 = vmax.f32 %v941, %v928
        %s943 = scalar_lea.vmem %s279, 12 [#allocation5]
        %944 = vst.msk [vmem:[%s943] sm:$0xf] %vm931, %v942
        %s945 = sand.u32 %s149, 1
        %s946 = scalar_lea.sflag [#allocation4], %s945
        %s947 = sand.u32 %s149, 1
        %s948 = smul.addr %s947, 16
        %s949 = scalar_lea.vmem [#allocation5], %s948
        // Predicated region
        $region41: #{tpu_custom_call.1} parent=35 // pred_check
          %p950 = pneg %p159
        $region42: #{tpu_custom_call.1} parent=35 // pred_check_branch
          %952 = sbr.rel (%p950) target = $region44
        $region43: #{tpu_custom_call.1} parent=35 // pred_region
          %s953 = smul.u32 4, %s26
          %s955 = ssub.s32 256, 256
          %956 = vsyncadd %s946, %s955
          %s957 = smul.addr %s25, 4
          %s958 = sadd.s32 %s953, %s957
          %s959 = smul.addr %s958, 64
          %s960 = scalar_lea.hbm %s4, %s959
          %s961 = sshll.u32 %s949, 4
          %s962 = int_to_ptr.vmem [resolvable:$true] %s961
          %967 = dma.vmem_to_hbm [thread:$0]  %s962, 256, %s960, %s946, 64, 64, 4
        $region44: #{tpu_custom_call.1} parent=35 // pred_fallthru
          _
      $region36: #{tpu_custom_call.1} parent=5 // pred_fallthru
        _
      %p968 = scmp.le.s32.totalorder 2, %s16
      // Predicated region
      $region45: #{tpu_custom_call.1} parent=5 // pred_check
        %p969 = pneg %p968
      $region46: #{tpu_custom_call.1} parent=5 // pred_check_branch
        %971 = sbr.rel (%p969) target = $region48
      $region47: #{tpu_custom_call.1} parent=5 // pred_region
        %s972 = ssub.s32 %s16, 2
        // Predicated region
        $region49: #{tpu_custom_call.1} parent=47 // pred_check
          %p973 = pneg %p165
        $region50: #{tpu_custom_call.1} parent=47 // pred_check_branch
          %975 = sbr.rel (%p973) target = $region52
        $region51: #{tpu_custom_call.1} parent=47 // pred_region
          %s976 = sand.u32 %s150, 1
          %s977 = scalar_lea.sflag [#allocation4], %s976
          %s978 = sand.u32 %s150, 1
          %s979 = smul.addr %s978, 16
          %s980 = scalar_lea.vmem [#allocation5], %s979
          %981 = dma.done %s977, 256
        $region52: #{tpu_custom_call.1} parent=47 // pred_fallthru
          _
      $region48: #{tpu_custom_call.1} parent=5 // pred_fallthru
        _
    $region6: #{tpu_custom_call.1} parent=1 // loop_footer
      %s20 = sadd.s32 1, %s16
    $region7: #{tpu_custom_call.1} parent=1 // loop_footer_branch
      %15 = sbr.rel target = $region3
    $region8: #{tpu_custom_call.1} parent=1 // loop_exit
      _
    %982 = vsyncpa [#allocation3], 1
    %s983 = scalar_lea.sflag [#allocation3], 1
    %984 = vsyncpa %s983, 1
    %985 = vsyncpa [#allocation4], 1
    %s986 = scalar_lea.sflag [#allocation4], 1
    %987 = vsyncpa %s986, 1

</llo_original>
